<compile_context>
chip_gen: v7x
topology: tpu7x:2x2x1
jax: 0.10.0
libtpu: 0.0.40
codegen_flags: <defaults>
</compile_context>

<pallas_src>
import functools

import jax
import jax.numpy as jnp
from jax import lax
from jax.experimental import pallas as pl
from jax.experimental.pallas import tpu as pltpu

LANE = 128   # fused output axis is padded to this
GROUP = 8    # one (8,128) f32 vreg tile of the slab per unrolled group


def _round_up(n, m):
    return ((n + m - 1) // m) * m


def _elm_rnn_kernel(x_ref, h0_ref, wx_ref, wh_ref, b_ref, slab_ref, h_scratch,
                    *, hidden_size, output_size):
    """One grid step processes a (TB, P) block of timesteps.

    x_ref:    (TB, I)  per-step inputs for this time block
    h0_ref:   (1, Hp)  initial hidden (zero-padded to Hp = round_up(H, 8))
    wx_ref:   (I, P)   input half of fused [i2h | i2o] weight (lane-padded)
    wh_ref:   (Hp, P)  hidden half of fused weight (rows >= H are zero)
    b_ref:    (1, P)   fused bias (lane-padded)
    slab_ref: (TB, P)  out; row t = [hidden_t (H) | sigmoid(out_t) (O) | 0]
    h_scratch:(1, Hp)  hidden carried across grid steps
    """
    TB, P = slab_ref.shape
    Hp = wh_ref.shape[0]
    n_groups = TB // GROUP

    @pl.when(pl.program_id(0) == 0)
    def _():
        h_scratch[...] = h0_ref[...]

    # Loop-resident operands (wh is only Hp x 128 f32 = a few vregs).
    wh = wh_ref[...]
    b = b_ref[...]

    # Time-parallel input projection + bias for every row of this block:
    # one MXU matmul, one lane-dense store. The slab doubles as the z_x buffer.
    slab_ref[...] = (
        jnp.dot(x_ref[...], wx_ref[...], preferred_element_type=jnp.float32)
        + b)

    cols = lax.broadcasted_iota(jnp.int32, (1, P), 1)
    is_out = (cols >= hidden_size) & (cols < hidden_size + output_size)

    # TODO(synk): for even shorter serial chains, pin `wh` in MXU weight regs
    # with pltpu.matmul_push_rhs / matmul_acc_lhs / matmul_pop, or exploit the
    # linear hidden update to block-parallelize the recurrence.
    def group_body(g, h):
        base = g * GROUP
        if not isinstance(base, int):
            base = pl.multiple_of(base, GROUP)
        # One lane-dense (8,128) load; the 8 serial steps run on vreg values.
        tile = slab_ref[pl.ds(base, GROUP), :]
        new_rows = []
        for j in range(GROUP):
            # z = [x_t, h_{t-1}] @ [W_i2h | W_i2o] + b   (K = Hp contraction)
            z = tile[j:j + 1, :] + jnp.dot(
                h, wh, preferred_element_type=jnp.float32)
            # raw z on hidden lanes, sigmoid on output lanes, 0 stays 0 on pad.
            new_rows.append(jnp.where(is_out, jax.nn.sigmoid(z), z))
            h = z[:, :Hp]                       # static lane slice carry
        # One lane-dense (8,128) store per group.
        slab_ref[pl.ds(base, GROUP), :] = jnp.concatenate(new_rows, axis=0)
        return h

    h = h_scratch[...]
    if n_groups == 1:
        h = group_body(0, h)                    # fully static for short blocks
    else:
        h = lax.fori_loop(0, n_groups, group_body, h)
    h_scratch[...] = h


def pack_params(w_i2h, b_i2h, w_i2o, b_i2o, input_size):
    """Fuse + pad the two Linear layers into kernel operands.

    w_i2h: (I+H, H), w_i2o: (I+H, O) in math layout (transpose of nn.Linear's
    (out, in) weight); b_i2h: (1, H), b_i2o: (1, O).
    """
    _, H = w_i2h.shape
    O = w_i2o.shape[1]
    P = _round_up(H + O, LANE)
    Hp = _round_up(H, 8)
    w = jnp.concatenate([w_i2h, w_i2o], axis=1)            # (C, H+O)
    w = jnp.pad(w, ((0, 0), (0, P - (H + O))))             # (C, P)
    wx = w[:input_size]                                    # (I, P)
    wh = jnp.pad(w[input_size:], ((0, Hp - H), (0, 0)))    # (Hp, P), rows>=H zero
    b = jnp.concatenate([b_i2h, b_i2o], axis=1)
    bp = jnp.pad(b, ((0, 0), (0, P - (H + O))))            # (1, P)
    # For v6e/v7x, casting wx/wh (and x) to bf16 halves VMEM/vregs; kept f32
    # here so numerics match the PyTorch module exactly.
    return wx, wh, bp, H, O, P


def elm_rnn_sequence(xs, h0, wx, wh, bp, hidden_size, output_size,
                     *, time_block=512):
    """Run the cell over xs: (T, I). Returns (outputs (T, O), h_T (1, H))."""
    T, I = xs.shape
    Hp, P = wh.shape

    TB = min(_round_up(T, GROUP), _round_up(time_block, GROUP))
    T_pad = _round_up(T, TB)
    xs_p = xs if T_pad == T else jnp.pad(xs, ((0, T_pad - T), (0, 0)))
    h0p = h0 if Hp == hidden_size else jnp.pad(
        h0, ((0, 0), (0, Hp - hidden_size)))

    kernel = functools.partial(
        _elm_rnn_kernel, hidden_size=hidden_size, output_size=output_size)

    slab = pl.pallas_call(
        kernel,
        out_shape=jax.ShapeDtypeStruct((T_pad, P), jnp.float32),
        grid=(T_pad // TB,),
        in_specs=[
            pl.BlockSpec((TB, I), lambda t: (t, 0)),    # x: pipelined over T
            pl.BlockSpec((1, Hp), lambda t: (0, 0)),    # h0
            pl.BlockSpec((I, P), lambda t: (0, 0)),     # wx
            pl.BlockSpec((Hp, P), lambda t: (0, 0)),    # wh
            pl.BlockSpec((1, P), lambda t: (0, 0)),     # bias
        ],
        out_specs=pl.BlockSpec((TB, P), lambda t: (t, 0)),
        scratch_shapes=[pltpu.VMEM((1, Hp), jnp.float32)],   # hidden carry
        compiler_params=pltpu.CompilerParams(
            dimension_semantics=("arbitrary",)),
    )(xs_p, h0p, wx, wh, bp)

    outputs = slab[:T, hidden_size:hidden_size + output_size]   # (T, O)
    h_final = slab[T - 1:T, :hidden_size]                       # (1, H)
    return outputs, h_final


def elm_rnn_forward(input_vector, hidden, wx, wh, bp, hidden_size, output_size):
    """Exact module forward: one step. For repeated decoding prefer
    elm_rnn_sequence (a T=1 call is dominated by launch overhead)."""
    outs, h_new = elm_rnn_sequence(input_vector[None, :], hidden, wx, wh, bp,
                                   hidden_size, output_size)
    return outs, h_new   # (1, O), (1, H)


def reference_step(input_vector, hidden, w_i2h, b_i2h, w_i2o, b_i2o):
    combined = jnp.concatenate([input_vector[None, :], hidden], axis=1)
    new_hidden = combined @ w_i2h + b_i2h
    output = jax.nn.sigmoid(combined @ w_i2o + b_i2o)
    return output, new_hidden


if __name__ == "__main__":
    input_size, hidden_size, output_size = 32, 32, 16
    seq_len = 8

    key = jax.random.PRNGKey(0)
    k_x, k_wh, k_bh, k_wo, k_bo = jax.random.split(key, 5)

    # Deterministic synthetic parameters (math layout = nn.Linear weight^T).
    w_i2h = jax.random.normal(
        k_wh, (input_size + hidden_size, hidden_size), jnp.float32) * 0.1
    b_i2h = jax.random.normal(k_bh, (1, hidden_size), jnp.float32) * 0.1
    w_i2o = jax.random.normal(
        k_wo, (input_size + hidden_size, output_size), jnp.float32) * 0.1
    b_i2o = jax.random.normal(k_bo, (1, output_size), jnp.float32) * 0.1

    xs = jax.random.normal(k_x, (seq_len, input_size), jnp.float32)
    h0 = jnp.zeros((1, hidden_size), jnp.float32)   # initHidden()

    wx, wh, bp, H, O, P = pack_params(w_i2h, b_i2h, w_i2o, b_i2o, input_size)

    # Sequence version: whole recurrence in one kernel launch.
    seq_fn = jax.jit(functools.partial(
        elm_rnn_sequence, hidden_size=H, output_size=O))
    outputs, h_final = seq_fn(xs, h0, wx, wh, bp)
    jax.block_until_ready((outputs, h_final))

    # Reference: unrolled per-step pure-JAX module forward.
    ref_outs = []
    h = h0
    for t in range(seq_len):
        o, h = reference_step(xs[t], h, w_i2h, b_i2h, w_i2o, b_i2o)
        ref_outs.append(o)
    ref_outs = jnp.concatenate(ref_outs, axis=0)

    assert outputs.shape == (seq_len, output_size)
    assert h_final.shape == (1, hidden_size)
    assert jnp.allclose(outputs, ref_outs, atol=1e-4, rtol=1e-4)
    assert jnp.allclose(h_final, h, atol=1e-4, rtol=1e-4)

    # Single-step call matching the module's forward(input_vector, hidden).
    step_fn = jax.jit(functools.partial(
        elm_rnn_forward, hidden_size=H, output_size=O))
    out1, hid1 = step_fn(xs[0], h0, wx, wh, bp)
    jax.block_until_ready((out1, hid1))
    ref_o1, ref_h1 = reference_step(xs[0], h0, w_i2h, b_i2h, w_i2o, b_i2o)
    assert out1.shape == (1, output_size) and hid1.shape == (1, hidden_size)
    assert jnp.allclose(out1, ref_o1, atol=1e-4, rtol=1e-4)
    assert jnp.allclose(hid1, ref_h1, atol=1e-4, rtol=1e-4)

    print("KERNEL_OK")
</pallas_src>

<mosaic_0001>
module attributes {stable_mosaic.version = 11 : i64} {
  func.func @_elm_rnn_kernel(%arg0: i32, %arg1: memref<8x32xf32, #tpu.memory_space<vmem>>, %arg2: memref<1x32xf32, #tpu.memory_space<vmem>>, %arg3: memref<32x128xf32, #tpu.memory_space<vmem>>, %arg4: memref<32x128xf32, #tpu.memory_space<vmem>>, %arg5: memref<1x128xf32, #tpu.memory_space<vmem>>, %arg6: memref<8x128xf32, #tpu.memory_space<vmem>>, %arg7: memref<1x32xf32, #tpu.memory_space<vmem>>) attributes {dimension_semantics = [#tpu.dimension_semantics<arbitrary>], iteration_bounds = array<i64: 1>, scalar_prefetch = 0 : i64, scratch_operands = 1 : i64, tpu.core_type = #tpu.core_type<tc>, window_params = [{transform_indices = @transform_0, window_bounds = array<i64: 8, 32>}, {pipeline_mode = #tpu.pipeline_mode<synchronous>, transform_indices = @transform_1, window_bounds = array<i64: 1, 32>}, {pipeline_mode = #tpu.pipeline_mode<synchronous>, transform_indices = @transform_2, window_bounds = array<i64: 32, 128>}, {pipeline_mode = #tpu.pipeline_mode<synchronous>, transform_indices = @transform_3, window_bounds = array<i64: 32, 128>}, {pipeline_mode = #tpu.pipeline_mode<synchronous>, transform_indices = @transform_4, window_bounds = array<i64: 1, 128>}, {transform_indices = @transform_5, window_bounds = array<i64: 8, 128>}]} {
    %c0_i32 = arith.constant 0 : i32
    %0 = arith.cmpi eq, %arg0, %c0_i32 : i32
    %1 = arith.extui %0 : i1 to i32
    %c0_i32_0 = arith.constant 0 : i32
    %2 = arith.cmpi ne, %1, %c0_i32_0 : i32
    scf.if %2 {
      %c0_34 = arith.constant 0 : index
      %c0_35 = arith.constant 0 : index
      %102 = vector.load %arg2[%c0_34, %c0_35] : memref<1x32xf32, #tpu.memory_space<vmem>>, vector<1x32xf32>
      %c0_36 = arith.constant 0 : index
      %c0_37 = arith.constant 0 : index
      %103 = vector.load %arg7[%c0_36, %c0_37] : memref<1x32xf32, #tpu.memory_space<vmem>>, vector<1x32xf32>
      tpu.vector_store %arg7[%c0_36, %c0_37], %102 {strides = array<i32>} : memref<1x32xf32, #tpu.memory_space<vmem>>, vector<1x32xf32>,
    } else {
    }
    %c0 = arith.constant 0 : index
    %c0_1 = arith.constant 0 : index
    %3 = vector.load %arg4[%c0, %c0_1] : memref<32x128xf32, #tpu.memory_space<vmem>>, vector<32x128xf32>
    %c0_2 = arith.constant 0 : index
    %c0_3 = arith.constant 0 : index
    %4 = vector.load %arg5[%c0_2, %c0_3] : memref<1x128xf32, #tpu.memory_space<vmem>>, vector<1x128xf32>
    %c0_4 = arith.constant 0 : index
    %c0_5 = arith.constant 0 : index
    %5 = vector.load %arg1[%c0_4, %c0_5] : memref<8x32xf32, #tpu.memory_space<vmem>>, vector<8x32xf32>
    %c0_6 = arith.constant 0 : index
    %c0_7 = arith.constant 0 : index
    %6 = vector.load %arg3[%c0_6, %c0_7] : memref<32x128xf32, #tpu.memory_space<vmem>>, vector<32x128xf32>
    %cst = arith.constant dense<0.000000e+00> : vector<8x128xf32>
    %7 = tpu.matmul %5, %6, %cst {dimension_numbers = #tpu.dot_dimension_numbers<[1], [0], [0], [1], [0, 0, 1, 1], [], []>} : vector<8x32xf32>, vector<32x128xf32>, vector<8x128xf32> -> vector<8x128xf32>
    %8 = vector.broadcast %4 : vector<1x128xf32> to vector<8x128xf32>
    %9 = arith.addf %7, %8 : vector<8x128xf32>
    %c0_8 = arith.constant 0 : index
    %c0_9 = arith.constant 0 : index
    %10 = vector.load %arg6[%c0_8, %c0_9] : memref<8x128xf32, #tpu.memory_space<vmem>>, vector<8x128xf32>
    tpu.vector_store %arg6[%c0_8, %c0_9], %9 {strides = array<i32>} : memref<8x128xf32, #tpu.memory_space<vmem>>, vector<8x128xf32>,
    %11 = tpu.iota {dimensions = array<i32: 1>} : vector<1x128xi32>
    %c32_i32 = arith.constant 32 : i32
    %12 = vector.broadcast %c32_i32 : i32 to vector<1x128xi32>
    %13 = arith.cmpi sge, %11, %12 : vector<1x128xi32>
    %c48_i32 = arith.constant 48 : i32
    %14 = vector.broadcast %c48_i32 : i32 to vector<1x128xi32>
    %15 = arith.cmpi slt, %11, %14 : vector<1x128xi32>
    %16 = arith.andi %13, %15 : vector<1x128xi1>
    %c0_10 = arith.constant 0 : index
    %c0_11 = arith.constant 0 : index
    %17 = vector.load %arg7[%c0_10, %c0_11] : memref<1x32xf32, #tpu.memory_space<vmem>>, vector<1x32xf32>
    %c0_12 = arith.constant 0 : index
    %c0_13 = arith.constant 0 : index
    %18 = vector.load %arg6[%c0_12, %c0_13] : memref<8x128xf32, #tpu.memory_space<vmem>>, vector<8x128xf32>
    %19 = vector.extract_strided_slice %18 {offsets = [0, 0], sizes = [1, 128], strides = [1, 1]} : vector<8x128xf32> to vector<1x128xf32>
    %cst_14 = arith.constant dense<0.000000e+00> : vector<1x128xf32>
    %20 = tpu.matmul %17, %3, %cst_14 {dimension_numbers = #tpu.dot_dimension_numbers<[1], [0], [0], [1], [0, 0, 1, 1], [], []>} : vector<1x32xf32>, vector<32x128xf32>, vector<1x128xf32> -> vector<1x128xf32>
    %21 = arith.addf %19, %20 : vector<1x128xf32>
    %22 = arith.negf %21 : vector<1x128xf32>
    %23 = math.exp %22 : vector<1x128xf32>
    %cst_15 = arith.constant 1.000000e+00 : f32
    %24 = vector.broadcast %cst_15 : f32 to vector<1x128xf32>
    %25 = arith.addf %24, %23 : vector<1x128xf32>
    %26 = arith.divf %24, %25 : vector<1x128xf32>
    %27 = arith.select %16, %26, %21 : vector<1x128xi1>, vector<1x128xf32>
    %28 = vector.extract_strided_slice %21 {offsets = [0, 0], sizes = [1, 32], strides = [1, 1]} : vector<1x128xf32> to vector<1x32xf32>
    %29 = vector.extract_strided_slice %18 {offsets = [1, 0], sizes = [1, 128], strides = [1, 1]} : vector<8x128xf32> to vector<1x128xf32>
    %cst_16 = arith.constant dense<0.000000e+00> : vector<1x128xf32>
    %30 = tpu.matmul %28, %3, %cst_16 {dimension_numbers = #tpu.dot_dimension_numbers<[1], [0], [0], [1], [0, 0, 1, 1], [], []>} : vector<1x32xf32>, vector<32x128xf32>, vector<1x128xf32> -> vector<1x128xf32>
    %31 = arith.addf %29, %30 : vector<1x128xf32>
    %32 = arith.negf %31 : vector<1x128xf32>
    %33 = math.exp %32 : vector<1x128xf32>
    %cst_17 = arith.constant 1.000000e+00 : f32
    %34 = vector.broadcast %cst_17 : f32 to vector<1x128xf32>
    %35 = arith.addf %34, %33 : vector<1x128xf32>
    %36 = arith.divf %34, %35 : vector<1x128xf32>
    %37 = arith.select %16, %36, %31 : vector<1x128xi1>, vector<1x128xf32>
    %38 = vector.extract_strided_slice %31 {offsets = [0, 0], sizes = [1, 32], strides = [1, 1]} : vector<1x128xf32> to vector<1x32xf32>
    %39 = vector.extract_strided_slice %18 {offsets = [2, 0], sizes = [1, 128], strides = [1, 1]} : vector<8x128xf32> to vector<1x128xf32>
    %cst_18 = arith.constant dense<0.000000e+00> : vector<1x128xf32>
    %40 = tpu.matmul %38, %3, %cst_18 {dimension_numbers = #tpu.dot_dimension_numbers<[1], [0], [0], [1], [0, 0, 1, 1], [], []>} : vector<1x32xf32>, vector<32x128xf32>, vector<1x128xf32> -> vector<1x128xf32>
    %41 = arith.addf %39, %40 : vector<1x128xf32>
    %42 = arith.negf %41 : vector<1x128xf32>
    %43 = math.exp %42 : vector<1x128xf32>
    %cst_19 = arith.constant 1.000000e+00 : f32
    %44 = vector.broadcast %cst_19 : f32 to vector<1x128xf32>
    %45 = arith.addf %44, %43 : vector<1x128xf32>
    %46 = arith.divf %44, %45 : vector<1x128xf32>
    %47 = arith.select %16, %46, %41 : vector<1x128xi1>, vector<1x128xf32>
    %48 = vector.extract_strided_slice %41 {offsets = [0, 0], sizes = [1, 32], strides = [1, 1]} : vector<1x128xf32> to vector<1x32xf32>
    %49 = vector.extract_strided_slice %18 {offsets = [3, 0], sizes = [1, 128], strides = [1, 1]} : vector<8x128xf32> to vector<1x128xf32>
    %cst_20 = arith.constant dense<0.000000e+00> : vector<1x128xf32>
    %50 = tpu.matmul %48, %3, %cst_20 {dimension_numbers = #tpu.dot_dimension_numbers<[1], [0], [0], [1], [0, 0, 1, 1], [], []>} : vector<1x32xf32>, vector<32x128xf32>, vector<1x128xf32> -> vector<1x128xf32>
    %51 = arith.addf %49, %50 : vector<1x128xf32>
    %52 = arith.negf %51 : vector<1x128xf32>
    %53 = math.exp %52 : vector<1x128xf32>
    %cst_21 = arith.constant 1.000000e+00 : f32
    %54 = vector.broadcast %cst_21 : f32 to vector<1x128xf32>
    %55 = arith.addf %54, %53 : vector<1x128xf32>
    %56 = arith.divf %54, %55 : vector<1x128xf32>
    %57 = arith.select %16, %56, %51 : vector<1x128xi1>, vector<1x128xf32>
    %58 = vector.extract_strided_slice %51 {offsets = [0, 0], sizes = [1, 32], strides = [1, 1]} : vector<1x128xf32> to vector<1x32xf32>
    %59 = vector.extract_strided_slice %18 {offsets = [4, 0], sizes = [1, 128], strides = [1, 1]} : vector<8x128xf32> to vector<1x128xf32>
    %cst_22 = arith.constant dense<0.000000e+00> : vector<1x128xf32>
    %60 = tpu.matmul %58, %3, %cst_22 {dimension_numbers = #tpu.dot_dimension_numbers<[1], [0], [0], [1], [0, 0, 1, 1], [], []>} : vector<1x32xf32>, vector<32x128xf32>, vector<1x128xf32> -> vector<1x128xf32>
    %61 = arith.addf %59, %60 : vector<1x128xf32>
    %62 = arith.negf %61 : vector<1x128xf32>
    %63 = math.exp %62 : vector<1x128xf32>
    %cst_23 = arith.constant 1.000000e+00 : f32
    %64 = vector.broadcast %cst_23 : f32 to vector<1x128xf32>
    %65 = arith.addf %64, %63 : vector<1x128xf32>
    %66 = arith.divf %64, %65 : vector<1x128xf32>
    %67 = arith.select %16, %66, %61 : vector<1x128xi1>, vector<1x128xf32>
    %68 = vector.extract_strided_slice %61 {offsets = [0, 0], sizes = [1, 32], strides = [1, 1]} : vector<1x128xf32> to vector<1x32xf32>
    %69 = vector.extract_strided_slice %18 {offsets = [5, 0], sizes = [1, 128], strides = [1, 1]} : vector<8x128xf32> to vector<1x128xf32>
    %cst_24 = arith.constant dense<0.000000e+00> : vector<1x128xf32>
    %70 = tpu.matmul %68, %3, %cst_24 {dimension_numbers = #tpu.dot_dimension_numbers<[1], [0], [0], [1], [0, 0, 1, 1], [], []>} : vector<1x32xf32>, vector<32x128xf32>, vector<1x128xf32> -> vector<1x128xf32>
    %71 = arith.addf %69, %70 : vector<1x128xf32>
    %72 = arith.negf %71 : vector<1x128xf32>
    %73 = math.exp %72 : vector<1x128xf32>
    %cst_25 = arith.constant 1.000000e+00 : f32
    %74 = vector.broadcast %cst_25 : f32 to vector<1x128xf32>
    %75 = arith.addf %74, %73 : vector<1x128xf32>
    %76 = arith.divf %74, %75 : vector<1x128xf32>
    %77 = arith.select %16, %76, %71 : vector<1x128xi1>, vector<1x128xf32>
    %78 = vector.extract_strided_slice %71 {offsets = [0, 0], sizes = [1, 32], strides = [1, 1]} : vector<1x128xf32> to vector<1x32xf32>
    %79 = vector.extract_strided_slice %18 {offsets = [6, 0], sizes = [1, 128], strides = [1, 1]} : vector<8x128xf32> to vector<1x128xf32>
    %cst_26 = arith.constant dense<0.000000e+00> : vector<1x128xf32>
    %80 = tpu.matmul %78, %3, %cst_26 {dimension_numbers = #tpu.dot_dimension_numbers<[1], [0], [0], [1], [0, 0, 1, 1], [], []>} : vector<1x32xf32>, vector<32x128xf32>, vector<1x128xf32> -> vector<1x128xf32>
    %81 = arith.addf %79, %80 : vector<1x128xf32>
    %82 = arith.negf %81 : vector<1x128xf32>
    %83 = math.exp %82 : vector<1x128xf32>
    %cst_27 = arith.constant 1.000000e+00 : f32
    %84 = vector.broadcast %cst_27 : f32 to vector<1x128xf32>
    %85 = arith.addf %84, %83 : vector<1x128xf32>
    %86 = arith.divf %84, %85 : vector<1x128xf32>
    %87 = arith.select %16, %86, %81 : vector<1x128xi1>, vector<1x128xf32>
    %88 = vector.extract_strided_slice %81 {offsets = [0, 0], sizes = [1, 32], strides = [1, 1]} : vector<1x128xf32> to vector<1x32xf32>
    %89 = vector.extract_strided_slice %18 {offsets = [7, 0], sizes = [1, 128], strides = [1, 1]} : vector<8x128xf32> to vector<1x128xf32>
    %cst_28 = arith.constant dense<0.000000e+00> : vector<1x128xf32>
    %90 = tpu.matmul %88, %3, %cst_28 {dimension_numbers = #tpu.dot_dimension_numbers<[1], [0], [0], [1], [0, 0, 1, 1], [], []>} : vector<1x32xf32>, vector<32x128xf32>, vector<1x128xf32> -> vector<1x128xf32>
    %91 = arith.addf %89, %90 : vector<1x128xf32>
    %92 = arith.negf %91 : vector<1x128xf32>
    %93 = math.exp %92 : vector<1x128xf32>
    %cst_29 = arith.constant 1.000000e+00 : f32
    %94 = vector.broadcast %cst_29 : f32 to vector<1x128xf32>
    %95 = arith.addf %94, %93 : vector<1x128xf32>
    %96 = arith.divf %94, %95 : vector<1x128xf32>
    %97 = arith.select %16, %96, %91 : vector<1x128xi1>, vector<1x128xf32>
    %98 = vector.extract_strided_slice %91 {offsets = [0, 0], sizes = [1, 32], strides = [1, 1]} : vector<1x128xf32> to vector<1x32xf32>
    %99 = tpu.concatenate %27, %37, %47, %57, %67, %77, %87, %97 in 0 : vector<1x128xf32>, vector<1x128xf32>, vector<1x128xf32>, vector<1x128xf32>, vector<1x128xf32>, vector<1x128xf32>, vector<1x128xf32>, vector<1x128xf32> -> vector<8x128xf32>
    %c0_30 = arith.constant 0 : index
    %c0_31 = arith.constant 0 : index
    %100 = vector.load %arg6[%c0_30, %c0_31] : memref<8x128xf32, #tpu.memory_space<vmem>>, vector<8x128xf32>
    tpu.vector_store %arg6[%c0_30, %c0_31], %99 {strides = array<i32>} : memref<8x128xf32, #tpu.memory_space<vmem>>, vector<8x128xf32>,
    %c0_32 = arith.constant 0 : index
    %c0_33 = arith.constant 0 : index
    %101 = vector.load %arg7[%c0_32, %c0_33] : memref<1x32xf32, #tpu.memory_space<vmem>>, vector<1x32xf32>
    tpu.vector_store %arg7[%c0_32, %c0_33], %98 {strides = array<i32>} : memref<1x32xf32, #tpu.memory_space<vmem>>, vector<1x32xf32>,
    return
  }
  func.func @transform_0(%arg0: i32) -> (i32, i32) {
    %c0_i32 = arith.constant 0 : i32
    %c0_i32_0 = arith.constant 0 : i32
    return %arg0, %c0_i32 : i32, i32
  }
  func.func @transform_1(%arg0: i32) -> (i32, i32) {
    %c0_i32 = arith.constant 0 : i32
    %c0_i32_0 = arith.constant 0 : i32
    %c0_i32_1 = arith.constant 0 : i32
    return %c0_i32, %c0_i32_0 : i32, i32
  }
  func.func @transform_2(%arg0: i32) -> (i32, i32) {
    %c0_i32 = arith.constant 0 : i32
    %c0_i32_0 = arith.constant 0 : i32
    %c0_i32_1 = arith.constant 0 : i32
    return %c0_i32, %c0_i32_0 : i32, i32
  }
  func.func @transform_3(%arg0: i32) -> (i32, i32) {
    %c0_i32 = arith.constant 0 : i32
    %c0_i32_0 = arith.constant 0 : i32
    %c0_i32_1 = arith.constant 0 : i32
    return %c0_i32, %c0_i32_0 : i32, i32
  }
  func.func @transform_4(%arg0: i32) -> (i32, i32) {
    %c0_i32 = arith.constant 0 : i32
    %c0_i32_0 = arith.constant 0 : i32
    %c0_i32_1 = arith.constant 0 : i32
    return %c0_i32, %c0_i32_0 : i32, i32
  }
  func.func @transform_5(%arg0: i32) -> (i32, i32) {
    %c0_i32 = arith.constant 0 : i32
    %c0_i32_0 = arith.constant 0 : i32
    return %arg0, %c0_i32 : i32, i32
  }
}

</mosaic_0001>

<llo_original>
// kernel: elm_rnn_sequence.1
$region0: #{elm_rnn_sequence.1}
  #allocation0 [shape = 'u32[]', space=smem, size = 0x4, offset = 0x4, fixed_abs, tag = 'smem constant byte address 0x4 - core index']
  #allocation1 [shape = 'u32[144,128]{1,0:T(1,128)}', space=vmem, size = 0x12000, scoped, tag = 'internal scratch']
  #allocation2 [shape = 'f32[1,32]{1,0:T(1,128)}', space=vmem, size = 0x200, scoped, tag = 'scratch operand']
  %s0 = inlined_call_operand.hbm [shape: f32[8,32], index: 0, kind: input, shape index: {}]
  %s1 = inlined_call_operand.vmem [shape: f32[1,32], index: 1, kind: input, shape index: {}]
  %s2 = inlined_call_operand.hbm [shape: f32[32,128], index: 2, kind: input, shape index: {}]
  %s3 = inlined_call_operand.hbm [shape: f32[32,128], index: 3, kind: input, shape index: {}]
  %s4 = inlined_call_operand.vmem [shape: f32[1,128], index: 4, kind: input, shape index: {}]
  %s5 = inlined_call_operand.vmem [shape: f32[8,128], index: 5, kind: output, shape index: {}]
  %s6 = sld [smem:[#allocation0]]
  $region46: #{elm_rnn_sequence.1} parent=0
    _
  %s8 = ssub.s32 1, %s6
  %s9 = scalar_select 0, %s8, %s6
  $region1: #{elm_rnn_sequence.1} parent=0
    #allocation3 [shape = 'u8[4096]{0}', space=vmem, size = 0x1000, scoped, tag = 'input window, operand 0, single buffered']
    #allocation4 [shape = 's32[1]{0}', space=sflag, size = 0x4, scoped, tag = 'scoped memory for elm_rnn_sequence.1']
    #allocation5 [shape = 'u8[16384]{0}', space=vmem, size = 0x4000, scoped, tag = 'input window, operand 2, single buffered']
    #allocation6 [shape = 's32[1]{0}', space=sflag, size = 0x4, scoped, tag = 'scoped memory for elm_rnn_sequence.1']
    #allocation7 [shape = 'u8[16384]{0}', space=vmem, size = 0x4000, scoped, tag = 'input window, operand 3, single buffered']
    %10 = vsyncpa [#allocation4], 0
    %11 = vsyncpa [#allocation6], 0
    // Predicated region
    $region2: #{elm_rnn_sequence.1} parent=1 // pred_check
      _
    $region3: #{elm_rnn_sequence.1} parent=1 // pred_check_branch
      %13 = sbr.rel (0) target = $region5
    $region4: #{elm_rnn_sequence.1} parent=1 // pred_region
      %s15 = ssub.s32 128, 128
      %16 = vsyncadd [#allocation4], %s15
      %s18 = sshll.u32 [#allocation3], 4
      %s19 = int_to_ptr.vmem [resolvable:$true] %s18
      %21 = dma.hbm_to_vmem [thread:$0]  %s0, 128, %s19, [#allocation4]
    $region5: #{elm_rnn_sequence.1} parent=1 // pred_fallthru
      _
    // Predicated region
    $region6: #{elm_rnn_sequence.1} parent=1 // pred_check
      _
    $region7: #{elm_rnn_sequence.1} parent=1 // pred_check_branch
      %23 = sbr.rel (0) target = $region9
    $region8: #{elm_rnn_sequence.1} parent=1 // pred_region
      _
    $region9: #{elm_rnn_sequence.1} parent=1 // pred_fallthru
      _
    // Predicated region
    $region10: #{elm_rnn_sequence.1} parent=1 // pred_check
      _
    $region11: #{elm_rnn_sequence.1} parent=1 // pred_check_branch
      %25 = sbr.rel (0) target = $region13
    $region12: #{elm_rnn_sequence.1} parent=1 // pred_region
      %s27 = ssub.s32 512, 512
      %28 = vsyncadd [#allocation6], %s27
      %s29 = sshll.u32 [#allocation5], 4
      %s30 = int_to_ptr.vmem [resolvable:$true] %s29
      %35 = dma.hbm_to_vmem [thread:$0]  %s2, 512, %s30, [#allocation6], 128, 128, 8
    $region13: #{elm_rnn_sequence.1} parent=1 // pred_fallthru
      _
    // Predicated region
    $region14: #{elm_rnn_sequence.1} parent=1 // pred_check
      _
    $region15: #{elm_rnn_sequence.1} parent=1 // pred_check_branch
      %37 = sbr.rel (0) target = $region17
    $region16: #{elm_rnn_sequence.1} parent=1 // pred_region
      %s39 = ssub.s32 512, 512
      %40 = vsyncadd [#allocation6], %s39
      %s41 = sshll.u32 [#allocation7], 4
      %s42 = int_to_ptr.vmem [resolvable:$true] %s41
      %47 = dma.hbm_to_vmem [thread:$0]  %s3, 512, %s42, [#allocation6], 128, 128, 8
    $region17: #{elm_rnn_sequence.1} parent=1 // pred_fallthru
      _
    // Predicated region
    $region18: #{elm_rnn_sequence.1} parent=1 // pred_check
      _
    $region19: #{elm_rnn_sequence.1} parent=1 // pred_check_branch
      %49 = sbr.rel (0) target = $region21
    $region20: #{elm_rnn_sequence.1} parent=1 // pred_region
      _
    $region21: #{elm_rnn_sequence.1} parent=1 // pred_fallthru
      _
    // Predicated region
    $region22: #{elm_rnn_sequence.1} parent=1 // pred_check
      _
    $region23: #{elm_rnn_sequence.1} parent=1 // pred_check_branch
      %51 = sbr.rel (0) target = $region25
    $region24: #{elm_rnn_sequence.1} parent=1 // pred_region
      %52 = dma.done [#allocation4], 128
    $region25: #{elm_rnn_sequence.1} parent=1 // pred_fallthru
      _
    // Predicated region
    $region26: #{elm_rnn_sequence.1} parent=1 // pred_check
      _
    $region27: #{elm_rnn_sequence.1} parent=1 // pred_check_branch
      %54 = sbr.rel (0) target = $region29
    $region28: #{elm_rnn_sequence.1} parent=1 // pred_region
      %55 = dma.done [#allocation6], 512
    $region29: #{elm_rnn_sequence.1} parent=1 // pred_fallthru
      _
    // Predicated region
    $region30: #{elm_rnn_sequence.1} parent=1 // pred_check
      _
    $region31: #{elm_rnn_sequence.1} parent=1 // pred_check_branch
      %57 = sbr.rel (0) target = $region33
    $region32: #{elm_rnn_sequence.1} parent=1 // pred_region
      %58 = dma.done [#allocation6], 512
    $region33: #{elm_rnn_sequence.1} parent=1 // pred_fallthru
      _
    %p59 = scmp.eq.s32.totalorder 0, 0
    // Predicated region
    $region34: #{elm_rnn_sequence.1} parent=1 // pred_check
      %p60 = pneg %p59
    $region35: #{elm_rnn_sequence.1} parent=1 // pred_check_branch
      %62 = sbr.rel (%p60) target = $region37
    $region36: #{elm_rnn_sequence.1} parent=1 // pred_region
      %v63 = vld [vmem:[%s1] sm:$0x1]
      %vm64 = vcmask 253952
      %65 = vst.msk [vmem:[#allocation2] sm:$0x1] %vm64, %v63
    $region37: #{elm_rnn_sequence.1} parent=1 // pred_fallthru
      _
    %v66 = vld [vmem:[#allocation7] sm:$0xff]
    %v67 = vld [vmem:[#allocation7 + $0x8] sm:$0xff]
    %v68 = vld [vmem:[#allocation7 + $0x10] sm:$0xff]
    %v69 = vld [vmem:[#allocation7 + $0x18] sm:$0xff]
    %v70 = vld [vmem:[%s4] sm:$0x1]
    %v71 = vld [vmem:[#allocation3] sm:$0xff]
    %v72 = vld [vmem:[#allocation5] sm:$0xff]
    %v73 = vld [vmem:[#allocation5 + $0x8] sm:$0xff]
    %v74 = vld [vmem:[#allocation5 + $0x10] sm:$0xff]
    %v75 = vld [vmem:[#allocation5 + $0x18] sm:$0xff]
    %v77 = vlaneseq
    %v78 = vshrl.u32 %v77, 7
    %v79 = vsub.s32 0, %v78
    %v80 = vrot.slane %v70, %v79
    %vm82 = vcmask 261120
    %v84 = vsel %vm82, %v71, 0
    %86 = vmatprep.subr.mxu0 0.0
    %87 = vmatpush1.msra.mxu0 %v72
    %88 = vmatprep.subr.mxu0 0.0
    %89 = vmatpush1.msra.mxu0 %v73
    %90 = vmatprep.subr.mxu0 0.0
    %91 = vmatpush1.msra.mxu0 %v74
    %92 = vmatprep.subr.mxu0 0.0
    %93 = vmatpush1.msra.mxu0 %v75
    %94 = vmatprep.subr.mxu0 0.0
    %95 = vmatpush1.msra.mxu0 0.0
    %96 = vmatprep.subr.mxu0 0.0
    %97 = vmatpush1.msra.mxu0 0.0
    %98 = vmatprep.subr.mxu0 0.0
    %99 = vmatpush1.msra.mxu0 0.0
    %100 = vmatprep.subr.mxu0 0.0
    %101 = vmatpush1.msra.mxu0 0.0
    %102 = vmatprep.subr.mxu0 0.0
    %103 = vmatpush1.msra.mxu0 0.0
    %104 = vmatprep.subr.mxu0 0.0
    %105 = vmatpush1.msra.mxu0 0.0
    %106 = vmatprep.subr.mxu0 0.0
    %107 = vmatpush1.msra.mxu0 0.0
    %108 = vmatprep.subr.mxu0 0.0
    %109 = vmatpush1.msra.mxu0 0.0
    %110 = vmatprep.subr.mxu0 0.0
    %111 = vmatpush1.msra.mxu0 0.0
    %112 = vmatprep.subr.mxu0 0.0
    %113 = vmatpush1.msra.mxu0 0.0
    %114 = vmatprep.subr.mxu0 0.0
    %115 = vmatpush1.msra.mxu0 0.0
    %116 = vmatprep.subr.mxu0 0.0
    %117 = vmatpush1.msra.mxu0 0.0
    %118 = vmatprep.subr.mxu0 0.0
    %119 = vmatpush1.msra.mxu0 0.0
    %120 = vmatprep.subr.mxu0 0.0
    %121 = vmatpush1.msra.mxu0 0.0
    %122 = vmatprep.subr.mxu0 0.0
    %123 = vmatpush1.msra.mxu0 0.0
    %124 = vmatprep.subr.mxu0 0.0
    %125 = vmatpush1.msra.mxu0 0.0
    %126 = vmatprep.subr.mxu0 0.0
    %127 = vmatpush1.msra.mxu0 0.0
    %128 = vmatprep.subr.mxu0 0.0
    %129 = vmatpush1.msra.mxu0 0.0
    %130 = vmatprep.subr.mxu0 0.0
    %131 = vmatpush1.msra.mxu0 0.0
    %132 = vmatprep.subr.mxu0 0.0
    %133 = vmatpush1.msra.mxu0 0.0
    %134 = vmatprep.subr.mxu0 0.0
    %135 = vmatpush1.msra.mxu0 0.0
    %136 = vmatprep.subr.mxu0 0.0
    %137 = vmatpush1.msra.mxu0 0.0
    %138 = vmatprep.subr.mxu0 0.0
    %139 = vmatpush1.msra.mxu0 0.0
    %140 = vmatprep.subr.mxu0 0.0
    %141 = vmatpush1.msra.mxu0 0.0
    %142 = vmatprep.subr.mxu0 0.0
    %143 = vmatpush1.msra.mxu0 0.0
    %144 = vmatprep.subr.mxu0 0.0
    %145 = vmatpush1.msra.mxu0 0.0
    %146 = vmatprep.subr.mxu0 0.0
    %147 = vmatpush1.msra.mxu0 0.0
    %148 = vmatprep.subr.mxu0 0.0
    %149 = vmatpush1.msra.mxu0 0.0
    %150 = vmatprep.mubr.f32.mxu0 0.0
    %151 = vmatmul.mubr.f32.gmra.mrb[0].mxu0 %v84
    %v152 = vpop.f32.mrb[0].mxu0
    %v153 = vadd.f32 %v80, %v152
    %v154 = vpop.f32.mrb[0].mxu0
    %155 = vdwg.mxu0
    %156 = vst [vmem:[%s5] sm:$0xff] %v153
    %v157 = vlaneseq
    %v158 = vand.u32 %v157, 127
    %vm159 = vcmp.ge.s32.totalorder %v158, 32
    %vm160 = vcmp.lt.s32.totalorder %v158, 48
    %vm161 = vmand %vm159, %vm160
    %v162 = vld [vmem:[#allocation2] sm:$0x1]
    %v163 = vld [vmem:[%s5] sm:$0xff]
    %v165 = vsel %vm82, %v162, 0
    %167 = vmatprep.subr.mxu0 0.0
    %168 = vmatpush1.msra.mxu0 %v66
    %169 = vmatprep.subr.mxu0 0.0
    %170 = vmatpush1.msra.mxu0 %v67
    %171 = vmatprep.subr.mxu0 0.0
    %172 = vmatpush1.msra.mxu0 %v68
    %173 = vmatprep.subr.mxu0 0.0
    %174 = vmatpush1.msra.mxu0 %v69
    %175 = vmatprep.subr.mxu0 0.0
    %176 = vmatpush1.msra.mxu0 0.0
    %177 = vmatprep.subr.mxu0 0.0
    %178 = vmatpush1.msra.mxu0 0.0
    %179 = vmatprep.subr.mxu0 0.0
    %180 = vmatpush1.msra.mxu0 0.0
    %181 = vmatprep.subr.mxu0 0.0
    %182 = vmatpush1.msra.mxu0 0.0
    %183 = vmatprep.subr.mxu0 0.0
    %184 = vmatpush1.msra.mxu0 0.0
    %185 = vmatprep.subr.mxu0 0.0
    %186 = vmatpush1.msra.mxu0 0.0
    %187 = vmatprep.subr.mxu0 0.0
    %188 = vmatpush1.msra.mxu0 0.0
    %189 = vmatprep.subr.mxu0 0.0
    %190 = vmatpush1.msra.mxu0 0.0
    %191 = vmatprep.subr.mxu0 0.0
    %192 = vmatpush1.msra.mxu0 0.0
    %193 = vmatprep.subr.mxu0 0.0
    %194 = vmatpush1.msra.mxu0 0.0
    %195 = vmatprep.subr.mxu0 0.0
    %196 = vmatpush1.msra.mxu0 0.0
    %197 = vmatprep.subr.mxu0 0.0
    %198 = vmatpush1.msra.mxu0 0.0
    %199 = vmatprep.subr.mxu0 0.0
    %200 = vmatpush1.msra.mxu0 0.0
    %201 = vmatprep.subr.mxu0 0.0
    %202 = vmatpush1.msra.mxu0 0.0
    %203 = vmatprep.subr.mxu0 0.0
    %204 = vmatpush1.msra.mxu0 0.0
    %205 = vmatprep.subr.mxu0 0.0
    %206 = vmatpush1.msra.mxu0 0.0
    %207 = vmatprep.subr.mxu0 0.0
    %208 = vmatpush1.msra.mxu0 0.0
    %209 = vmatprep.subr.mxu0 0.0
    %210 = vmatpush1.msra.mxu0 0.0
    %211 = vmatprep.subr.mxu0 0.0
    %212 = vmatpush1.msra.mxu0 0.0
    %213 = vmatprep.subr.mxu0 0.0
    %214 = vmatpush1.msra.mxu0 0.0
    %215 = vmatprep.subr.mxu0 0.0
    %216 = vmatpush1.msra.mxu0 0.0
    %217 = vmatprep.subr.mxu0 0.0
    %218 = vmatpush1.msra.mxu0 0.0
    %219 = vmatprep.subr.mxu0 0.0
    %220 = vmatpush1.msra.mxu0 0.0
    %221 = vmatprep.subr.mxu0 0.0
    %222 = vmatpush1.msra.mxu0 0.0
    %223 = vmatprep.subr.mxu0 0.0
    %224 = vmatpush1.msra.mxu0 0.0
    %225 = vmatprep.subr.mxu0 0.0
    %226 = vmatpush1.msra.mxu0 0.0
    %227 = vmatprep.subr.mxu0 0.0
    %228 = vmatpush1.msra.mxu0 0.0
    %229 = vmatprep.subr.mxu0 0.0
    %230 = vmatpush1.msra.mxu0 0.0
    %231 = vmatprep.mubr.f32.mxu0 0.0
    %232 = vmatmul.mubr.f32.gmra.mrb[0].mxu0 %v165
    %v233 = vpop.f32.mrb[0].mxu0
    %v234 = vadd.f32 0.0, %v233
    %v235 = vpop.f32.mrb[0].mxu0
    %236 = vdwg.mxu0
    %v237 = vadd.f32 %v163, %v234
    %v238 = vxor.u32 %v237, 2147483648
    %v239 = vmul.f32 %v238, 1.442695
    %v240 = vpow.pop %v239
    %v241 = vadd.f32 %v240, 1.0
    %v242 = vrcp.pop %v241
    %v243 = vmul.f32 1.0, %v242
    %v244 = vsel %vm161, %v243, %v237
    %v246 = vsel %vm82, %v237, 0
    %248 = vmatprep.subr.mxu0 0.0
    %249 = vmatpush1.msra.mxu0 %v66
    %250 = vmatprep.subr.mxu0 0.0
    %251 = vmatpush1.msra.mxu0 %v67
    %252 = vmatprep.subr.mxu0 0.0
    %253 = vmatpush1.msra.mxu0 %v68
    %254 = vmatprep.subr.mxu0 0.0
    %255 = vmatpush1.msra.mxu0 %v69
    %256 = vmatprep.subr.mxu0 0.0
    %257 = vmatpush1.msra.mxu0 0.0
    %258 = vmatprep.subr.mxu0 0.0
    %259 = vmatpush1.msra.mxu0 0.0
    %260 = vmatprep.subr.mxu0 0.0
    %261 = vmatpush1.msra.mxu0 0.0
    %262 = vmatprep.subr.mxu0 0.0
    %263 = vmatpush1.msra.mxu0 0.0
    %264 = vmatprep.subr.mxu0 0.0
    %265 = vmatpush1.msra.mxu0 0.0
    %266 = vmatprep.subr.mxu0 0.0
    %267 = vmatpush1.msra.mxu0 0.0
    %268 = vmatprep.subr.mxu0 0.0
    %269 = vmatpush1.msra.mxu0 0.0
    %270 = vmatprep.subr.mxu0 0.0
    %271 = vmatpush1.msra.mxu0 0.0
    %272 = vmatprep.subr.mxu0 0.0
    %273 = vmatpush1.msra.mxu0 0.0
    %274 = vmatprep.subr.mxu0 0.0
    %275 = vmatpush1.msra.mxu0 0.0
    %276 = vmatprep.subr.mxu0 0.0
    %277 = vmatpush1.msra.mxu0 0.0
    %278 = vmatprep.subr.mxu0 0.0
    %279 = vmatpush1.msra.mxu0 0.0
    %280 = vmatprep.subr.mxu0 0.0
    %281 = vmatpush1.msra.mxu0 0.0
    %282 = vmatprep.subr.mxu0 0.0
    %283 = vmatpush1.msra.mxu0 0.0
    %284 = vmatprep.subr.mxu0 0.0
    %285 = vmatpush1.msra.mxu0 0.0
    %286 = vmatprep.subr.mxu0 0.0
    %287 = vmatpush1.msra.mxu0 0.0
    %288 = vmatprep.subr.mxu0 0.0
    %289 = vmatpush1.msra.mxu0 0.0
    %290 = vmatprep.subr.mxu0 0.0
    %291 = vmatpush1.msra.mxu0 0.0
    %292 = vmatprep.subr.mxu0 0.0
    %293 = vmatpush1.msra.mxu0 0.0
    %294 = vmatprep.subr.mxu0 0.0
    %295 = vmatpush1.msra.mxu0 0.0
    %296 = vmatprep.subr.mxu0 0.0
    %297 = vmatpush1.msra.mxu0 0.0
    %298 = vmatprep.subr.mxu0 0.0
    %299 = vmatpush1.msra.mxu0 0.0
    %300 = vmatprep.subr.mxu0 0.0
    %301 = vmatpush1.msra.mxu0 0.0
    %302 = vmatprep.subr.mxu0 0.0
    %303 = vmatpush1.msra.mxu0 0.0
    %304 = vmatprep.subr.mxu0 0.0
    %305 = vmatpush1.msra.mxu0 0.0
    %306 = vmatprep.subr.mxu0 0.0
    %307 = vmatpush1.msra.mxu0 0.0
    %308 = vmatprep.subr.mxu0 0.0
    %309 = vmatpush1.msra.mxu0 0.0
    %310 = vmatprep.subr.mxu0 0.0
    %311 = vmatpush1.msra.mxu0 0.0
    %312 = vmatprep.mubr.f32.mxu0 0.0
    %313 = vmatmul.mubr.f32.gmra.mrb[0].mxu0 %v246
    %v314 = vpop.f32.mrb[0].mxu0
    %v315 = vadd.f32 0.0, %v314
    %v316 = vpop.f32.mrb[0].mxu0
    %317 = vdwg.mxu0
    %v319 = vrot.slane %v315, 7
    %v321 = vadd.f32 %v163, %v319
    %v322 = vxor.u32 %v321, 2147483648
    %v323 = vmul.f32 %v322, 1.442695
    %v324 = vpow.pop %v323
    %v325 = vadd.f32 %v324, 1.0
    %v326 = vrcp.pop %v325
    %v327 = vmul.f32 1.0, %v326
    %v328 = vsel %vm161, %v327, %v321
    %v330 = vrot.slane %v321, 1
    %v331 = vsel %vm82, %v330, 0
    %333 = vmatprep.subr.mxu0 0.0
    %334 = vmatpush1.msra.mxu0 %v66
    %335 = vmatprep.subr.mxu0 0.0
    %336 = vmatpush1.msra.mxu0 %v67
    %337 = vmatprep.subr.mxu0 0.0
    %338 = vmatpush1.msra.mxu0 %v68
    %339 = vmatprep.subr.mxu0 0.0
    %340 = vmatpush1.msra.mxu0 %v69
    %341 = vmatprep.subr.mxu0 0.0
    %342 = vmatpush1.msra.mxu0 0.0
    %343 = vmatprep.subr.mxu0 0.0
    %344 = vmatpush1.msra.mxu0 0.0
    %345 = vmatprep.subr.mxu0 0.0
    %346 = vmatpush1.msra.mxu0 0.0
    %347 = vmatprep.subr.mxu0 0.0
    %348 = vmatpush1.msra.mxu0 0.0
    %349 = vmatprep.subr.mxu0 0.0
    %350 = vmatpush1.msra.mxu0 0.0
    %351 = vmatprep.subr.mxu0 0.0
    %352 = vmatpush1.msra.mxu0 0.0
    %353 = vmatprep.subr.mxu0 0.0
    %354 = vmatpush1.msra.mxu0 0.0
    %355 = vmatprep.subr.mxu0 0.0
    %356 = vmatpush1.msra.mxu0 0.0
    %357 = vmatprep.subr.mxu0 0.0
    %358 = vmatpush1.msra.mxu0 0.0
    %359 = vmatprep.subr.mxu0 0.0
    %360 = vmatpush1.msra.mxu0 0.0
    %361 = vmatprep.subr.mxu0 0.0
    %362 = vmatpush1.msra.mxu0 0.0
    %363 = vmatprep.subr.mxu0 0.0
    %364 = vmatpush1.msra.mxu0 0.0
    %365 = vmatprep.subr.mxu0 0.0
    %366 = vmatpush1.msra.mxu0 0.0
    %367 = vmatprep.subr.mxu0 0.0
    %368 = vmatpush1.msra.mxu0 0.0
    %369 = vmatprep.subr.mxu0 0.0
    %370 = vmatpush1.msra.mxu0 0.0
    %371 = vmatprep.subr.mxu0 0.0
    %372 = vmatpush1.msra.mxu0 0.0
    %373 = vmatprep.subr.mxu0 0.0
    %374 = vmatpush1.msra.mxu0 0.0
    %375 = vmatprep.subr.mxu0 0.0
    %376 = vmatpush1.msra.mxu0 0.0
    %377 = vmatprep.subr.mxu0 0.0
    %378 = vmatpush1.msra.mxu0 0.0
    %379 = vmatprep.subr.mxu0 0.0
    %380 = vmatpush1.msra.mxu0 0.0
    %381 = vmatprep.subr.mxu0 0.0
    %382 = vmatpush1.msra.mxu0 0.0
    %383 = vmatprep.subr.mxu0 0.0
    %384 = vmatpush1.msra.mxu0 0.0
    %385 = vmatprep.subr.mxu0 0.0
    %386 = vmatpush1.msra.mxu0 0.0
    %387 = vmatprep.subr.mxu0 0.0
    %388 = vmatpush1.msra.mxu0 0.0
    %389 = vmatprep.subr.mxu0 0.0
    %390 = vmatpush1.msra.mxu0 0.0
    %391 = vmatprep.subr.mxu0 0.0
    %392 = vmatpush1.msra.mxu0 0.0
    %393 = vmatprep.subr.mxu0 0.0
    %394 = vmatpush1.msra.mxu0 0.0
    %395 = vmatprep.subr.mxu0 0.0
    %396 = vmatpush1.msra.mxu0 0.0
    %397 = vmatprep.mubr.f32.mxu0 0.0
    %398 = vmatmul.mubr.f32.gmra.mrb[0].mxu0 %v331
    %v399 = vpop.f32.mrb[0].mxu0
    %v400 = vadd.f32 0.0, %v399
    %v401 = vpop.f32.mrb[0].mxu0
    %402 = vdwg.mxu0
    %v404 = vrot.slane %v400, 6
    %v406 = vadd.f32 %v163, %v404
    %v407 = vxor.u32 %v406, 2147483648
    %v408 = vmul.f32 %v407, 1.442695
    %v409 = vpow.pop %v408
    %v410 = vadd.f32 %v409, 1.0
    %v411 = vrcp.pop %v410
    %v412 = vmul.f32 1.0, %v411
    %v413 = vsel %vm161, %v412, %v406
    %v415 = vrot.slane %v406, 2
    %v416 = vsel %vm82, %v415, 0
    %418 = vmatprep.subr.mxu0 0.0
    %419 = vmatpush1.msra.mxu0 %v66
    %420 = vmatprep.subr.mxu0 0.0
    %421 = vmatpush1.msra.mxu0 %v67
    %422 = vmatprep.subr.mxu0 0.0
    %423 = vmatpush1.msra.mxu0 %v68
    %424 = vmatprep.subr.mxu0 0.0
    %425 = vmatpush1.msra.mxu0 %v69
    %426 = vmatprep.subr.mxu0 0.0
    %427 = vmatpush1.msra.mxu0 0.0
    %428 = vmatprep.subr.mxu0 0.0
    %429 = vmatpush1.msra.mxu0 0.0
    %430 = vmatprep.subr.mxu0 0.0
    %431 = vmatpush1.msra.mxu0 0.0
    %432 = vmatprep.subr.mxu0 0.0
    %433 = vmatpush1.msra.mxu0 0.0
    %434 = vmatprep.subr.mxu0 0.0
    %435 = vmatpush1.msra.mxu0 0.0
    %436 = vmatprep.subr.mxu0 0.0
    %437 = vmatpush1.msra.mxu0 0.0
    %438 = vmatprep.subr.mxu0 0.0
    %439 = vmatpush1.msra.mxu0 0.0
    %440 = vmatprep.subr.mxu0 0.0
    %441 = vmatpush1.msra.mxu0 0.0
    %442 = vmatprep.subr.mxu0 0.0
    %443 = vmatpush1.msra.mxu0 0.0
    %444 = vmatprep.subr.mxu0 0.0
    %445 = vmatpush1.msra.mxu0 0.0
    %446 = vmatprep.subr.mxu0 0.0
    %447 = vmatpush1.msra.mxu0 0.0
    %448 = vmatprep.subr.mxu0 0.0
    %449 = vmatpush1.msra.mxu0 0.0
    %450 = vmatprep.subr.mxu0 0.0
    %451 = vmatpush1.msra.mxu0 0.0
    %452 = vmatprep.subr.mxu0 0.0
    %453 = vmatpush1.msra.mxu0 0.0
    %454 = vmatprep.subr.mxu0 0.0
    %455 = vmatpush1.msra.mxu0 0.0
    %456 = vmatprep.subr.mxu0 0.0
    %457 = vmatpush1.msra.mxu0 0.0
    %458 = vmatprep.subr.mxu0 0.0
    %459 = vmatpush1.msra.mxu0 0.0
    %460 = vmatprep.subr.mxu0 0.0
    %461 = vmatpush1.msra.mxu0 0.0
    %462 = vmatprep.subr.mxu0 0.0
    %463 = vmatpush1.msra.mxu0 0.0
    %464 = vmatprep.subr.mxu0 0.0
    %465 = vmatpush1.msra.mxu0 0.0
    %466 = vmatprep.subr.mxu0 0.0
    %467 = vmatpush1.msra.mxu0 0.0
    %468 = vmatprep.subr.mxu0 0.0
    %469 = vmatpush1.msra.mxu0 0.0
    %470 = vmatprep.subr.mxu0 0.0
    %471 = vmatpush1.msra.mxu0 0.0
    %472 = vmatprep.subr.mxu0 0.0
    %473 = vmatpush1.msra.mxu0 0.0
    %474 = vmatprep.subr.mxu0 0.0
    %475 = vmatpush1.msra.mxu0 0.0
    %476 = vmatprep.subr.mxu0 0.0
    %477 = vmatpush1.msra.mxu0 0.0
    %478 = vmatprep.subr.mxu0 0.0
    %479 = vmatpush1.msra.mxu0 0.0
    %480 = vmatprep.subr.mxu0 0.0
    %481 = vmatpush1.msra.mxu0 0.0
    %482 = vmatprep.mubr.f32.mxu0 0.0
    %483 = vmatmul.mubr.f32.gmra.mrb[0].mxu0 %v416
    %v484 = vpop.f32.mrb[0].mxu0
    %v485 = vadd.f32 0.0, %v484
    %v486 = vpop.f32.mrb[0].mxu0
    %487 = vdwg.mxu0
    %v489 = vrot.slane %v485, 5
    %v491 = vadd.f32 %v163, %v489
    %v492 = vxor.u32 %v491, 2147483648
    %v493 = vmul.f32 %v492, 1.442695
    %v494 = vpow.pop %v493
    %v495 = vadd.f32 %v494, 1.0
    %v496 = vrcp.pop %v495
    %v497 = vmul.f32 1.0, %v496
    %v498 = vsel %vm161, %v497, %v491
    %v500 = vrot.slane %v491, 3
    %v501 = vsel %vm82, %v500, 0
    %503 = vmatprep.subr.mxu0 0.0
    %504 = vmatpush1.msra.mxu0 %v66
    %505 = vmatprep.subr.mxu0 0.0
    %506 = vmatpush1.msra.mxu0 %v67
    %507 = vmatprep.subr.mxu0 0.0
    %508 = vmatpush1.msra.mxu0 %v68
    %509 = vmatprep.subr.mxu0 0.0
    %510 = vmatpush1.msra.mxu0 %v69
    %511 = vmatprep.subr.mxu0 0.0
    %512 = vmatpush1.msra.mxu0 0.0
    %513 = vmatprep.subr.mxu0 0.0
    %514 = vmatpush1.msra.mxu0 0.0
    %515 = vmatprep.subr.mxu0 0.0
    %516 = vmatpush1.msra.mxu0 0.0
    %517 = vmatprep.subr.mxu0 0.0
    %518 = vmatpush1.msra.mxu0 0.0
    %519 = vmatprep.subr.mxu0 0.0
    %520 = vmatpush1.msra.mxu0 0.0
    %521 = vmatprep.subr.mxu0 0.0
    %522 = vmatpush1.msra.mxu0 0.0
    %523 = vmatprep.subr.mxu0 0.0
    %524 = vmatpush1.msra.mxu0 0.0
    %525 = vmatprep.subr.mxu0 0.0
    %526 = vmatpush1.msra.mxu0 0.0
    %527 = vmatprep.subr.mxu0 0.0
    %528 = vmatpush1.msra.mxu0 0.0
    %529 = vmatprep.subr.mxu0 0.0
    %530 = vmatpush1.msra.mxu0 0.0
    %531 = vmatprep.subr.mxu0 0.0
    %532 = vmatpush1.msra.mxu0 0.0
    %533 = vmatprep.subr.mxu0 0.0
    %534 = vmatpush1.msra.mxu0 0.0
    %535 = vmatprep.subr.mxu0 0.0
    %536 = vmatpush1.msra.mxu0 0.0
    %537 = vmatprep.subr.mxu0 0.0
    %538 = vmatpush1.msra.mxu0 0.0
    %539 = vmatprep.subr.mxu0 0.0
    %540 = vmatpush1.msra.mxu0 0.0
    %541 = vmatprep.subr.mxu0 0.0
    %542 = vmatpush1.msra.mxu0 0.0
    %543 = vmatprep.subr.mxu0 0.0
    %544 = vmatpush1.msra.mxu0 0.0
    %545 = vmatprep.subr.mxu0 0.0
    %546 = vmatpush1.msra.mxu0 0.0
    %547 = vmatprep.subr.mxu0 0.0
    %548 = vmatpush1.msra.mxu0 0.0
    %549 = vmatprep.subr.mxu0 0.0
    %550 = vmatpush1.msra.mxu0 0.0
    %551 = vmatprep.subr.mxu0 0.0
    %552 = vmatpush1.msra.mxu0 0.0
    %553 = vmatprep.subr.mxu0 0.0
    %554 = vmatpush1.msra.mxu0 0.0
    %555 = vmatprep.subr.mxu0 0.0
    %556 = vmatpush1.msra.mxu0 0.0
    %557 = vmatprep.subr.mxu0 0.0
    %558 = vmatpush1.msra.mxu0 0.0
    %559 = vmatprep.subr.mxu0 0.0
    %560 = vmatpush1.msra.mxu0 0.0
    %561 = vmatprep.subr.mxu0 0.0
    %562 = vmatpush1.msra.mxu0 0.0
    %563 = vmatprep.subr.mxu0 0.0
    %564 = vmatpush1.msra.mxu0 0.0
    %565 = vmatprep.subr.mxu0 0.0
    %566 = vmatpush1.msra.mxu0 0.0
    %567 = vmatprep.mubr.f32.mxu0 0.0
    %568 = vmatmul.mubr.f32.gmra.mrb[0].mxu0 %v501
    %v569 = vpop.f32.mrb[0].mxu0
    %v570 = vadd.f32 0.0, %v569
    %v571 = vpop.f32.mrb[0].mxu0
    %572 = vdwg.mxu0
    %v574 = vrot.slane %v570, 4
    %v576 = vadd.f32 %v163, %v574
    %v577 = vxor.u32 %v576, 2147483648
    %v578 = vmul.f32 %v577, 1.442695
    %v579 = vpow.pop %v578
    %v580 = vadd.f32 %v579, 1.0
    %v581 = vrcp.pop %v580
    %v582 = vmul.f32 1.0, %v581
    %v583 = vsel %vm161, %v582, %v576
    %v585 = vrot.slane %v576, 4
    %v586 = vsel %vm82, %v585, 0
    %588 = vmatprep.subr.mxu0 0.0
    %589 = vmatpush1.msra.mxu0 %v66
    %590 = vmatprep.subr.mxu0 0.0
    %591 = vmatpush1.msra.mxu0 %v67
    %592 = vmatprep.subr.mxu0 0.0
    %593 = vmatpush1.msra.mxu0 %v68
    %594 = vmatprep.subr.mxu0 0.0
    %595 = vmatpush1.msra.mxu0 %v69
    %596 = vmatprep.subr.mxu0 0.0
    %597 = vmatpush1.msra.mxu0 0.0
    %598 = vmatprep.subr.mxu0 0.0
    %599 = vmatpush1.msra.mxu0 0.0
    %600 = vmatprep.subr.mxu0 0.0
    %601 = vmatpush1.msra.mxu0 0.0
    %602 = vmatprep.subr.mxu0 0.0
    %603 = vmatpush1.msra.mxu0 0.0
    %604 = vmatprep.subr.mxu0 0.0
    %605 = vmatpush1.msra.mxu0 0.0
    %606 = vmatprep.subr.mxu0 0.0
    %607 = vmatpush1.msra.mxu0 0.0
    %608 = vmatprep.subr.mxu0 0.0
    %609 = vmatpush1.msra.mxu0 0.0
    %610 = vmatprep.subr.mxu0 0.0
    %611 = vmatpush1.msra.mxu0 0.0
    %612 = vmatprep.subr.mxu0 0.0
    %613 = vmatpush1.msra.mxu0 0.0
    %614 = vmatprep.subr.mxu0 0.0
    %615 = vmatpush1.msra.mxu0 0.0
    %616 = vmatprep.subr.mxu0 0.0
    %617 = vmatpush1.msra.mxu0 0.0
    %618 = vmatprep.subr.mxu0 0.0
    %619 = vmatpush1.msra.mxu0 0.0
    %620 = vmatprep.subr.mxu0 0.0
    %621 = vmatpush1.msra.mxu0 0.0
    %622 = vmatprep.subr.mxu0 0.0
    %623 = vmatpush1.msra.mxu0 0.0
    %624 = vmatprep.subr.mxu0 0.0
    %625 = vmatpush1.msra.mxu0 0.0
    %626 = vmatprep.subr.mxu0 0.0
    %627 = vmatpush1.msra.mxu0 0.0
    %628 = vmatprep.subr.mxu0 0.0
    %629 = vmatpush1.msra.mxu0 0.0
    %630 = vmatprep.subr.mxu0 0.0
    %631 = vmatpush1.msra.mxu0 0.0
    %632 = vmatprep.subr.mxu0 0.0
    %633 = vmatpush1.msra.mxu0 0.0
    %634 = vmatprep.subr.mxu0 0.0
    %635 = vmatpush1.msra.mxu0 0.0
    %636 = vmatprep.subr.mxu0 0.0
    %637 = vmatpush1.msra.mxu0 0.0
    %638 = vmatprep.subr.mxu0 0.0
    %639 = vmatpush1.msra.mxu0 0.0
    %640 = vmatprep.subr.mxu0 0.0
    %641 = vmatpush1.msra.mxu0 0.0
    %642 = vmatprep.subr.mxu0 0.0
    %643 = vmatpush1.msra.mxu0 0.0
    %644 = vmatprep.subr.mxu0 0.0
    %645 = vmatpush1.msra.mxu0 0.0
    %646 = vmatprep.subr.mxu0 0.0
    %647 = vmatpush1.msra.mxu0 0.0
    %648 = vmatprep.subr.mxu0 0.0
    %649 = vmatpush1.msra.mxu0 0.0
    %650 = vmatprep.subr.mxu0 0.0
    %651 = vmatpush1.msra.mxu0 0.0
    %652 = vmatprep.mubr.f32.mxu0 0.0
    %653 = vmatmul.mubr.f32.gmra.mrb[0].mxu0 %v586
    %v654 = vpop.f32.mrb[0].mxu0
    %v655 = vadd.f32 0.0, %v654
    %v656 = vpop.f32.mrb[0].mxu0
    %657 = vdwg.mxu0
    %v659 = vrot.slane %v655, 3
    %v661 = vadd.f32 %v163, %v659
    %v662 = vxor.u32 %v661, 2147483648
    %v663 = vmul.f32 %v662, 1.442695
    %v664 = vpow.pop %v663
    %v665 = vadd.f32 %v664, 1.0
    %v666 = vrcp.pop %v665
    %v667 = vmul.f32 1.0, %v666
    %v668 = vsel %vm161, %v667, %v661
    %v670 = vrot.slane %v661, 5
    %v671 = vsel %vm82, %v670, 0
    %673 = vmatprep.subr.mxu0 0.0
    %674 = vmatpush1.msra.mxu0 %v66
    %675 = vmatprep.subr.mxu0 0.0
    %676 = vmatpush1.msra.mxu0 %v67
    %677 = vmatprep.subr.mxu0 0.0
    %678 = vmatpush1.msra.mxu0 %v68
    %679 = vmatprep.subr.mxu0 0.0
    %680 = vmatpush1.msra.mxu0 %v69
    %681 = vmatprep.subr.mxu0 0.0
    %682 = vmatpush1.msra.mxu0 0.0
    %683 = vmatprep.subr.mxu0 0.0
    %684 = vmatpush1.msra.mxu0 0.0
    %685 = vmatprep.subr.mxu0 0.0
    %686 = vmatpush1.msra.mxu0 0.0
    %687 = vmatprep.subr.mxu0 0.0
    %688 = vmatpush1.msra.mxu0 0.0
    %689 = vmatprep.subr.mxu0 0.0
    %690 = vmatpush1.msra.mxu0 0.0
    %691 = vmatprep.subr.mxu0 0.0
    %692 = vmatpush1.msra.mxu0 0.0
    %693 = vmatprep.subr.mxu0 0.0
    %694 = vmatpush1.msra.mxu0 0.0
    %695 = vmatprep.subr.mxu0 0.0
    %696 = vmatpush1.msra.mxu0 0.0
    %697 = vmatprep.subr.mxu0 0.0
    %698 = vmatpush1.msra.mxu0 0.0
    %699 = vmatprep.subr.mxu0 0.0
    %700 = vmatpush1.msra.mxu0 0.0
    %701 = vmatprep.subr.mxu0 0.0
    %702 = vmatpush1.msra.mxu0 0.0
    %703 = vmatprep.subr.mxu0 0.0
    %704 = vmatpush1.msra.mxu0 0.0
    %705 = vmatprep.subr.mxu0 0.0
    %706 = vmatpush1.msra.mxu0 0.0
    %707 = vmatprep.subr.mxu0 0.0
    %708 = vmatpush1.msra.mxu0 0.0
    %709 = vmatprep.subr.mxu0 0.0
    %710 = vmatpush1.msra.mxu0 0.0
    %711 = vmatprep.subr.mxu0 0.0
    %712 = vmatpush1.msra.mxu0 0.0
    %713 = vmatprep.subr.mxu0 0.0
    %714 = vmatpush1.msra.mxu0 0.0
    %715 = vmatprep.subr.mxu0 0.0
    %716 = vmatpush1.msra.mxu0 0.0
    %717 = vmatprep.subr.mxu0 0.0
    %718 = vmatpush1.msra.mxu0 0.0
    %719 = vmatprep.subr.mxu0 0.0
    %720 = vmatpush1.msra.mxu0 0.0
    %721 = vmatprep.subr.mxu0 0.0
    %722 = vmatpush1.msra.mxu0 0.0
    %723 = vmatprep.subr.mxu0 0.0
    %724 = vmatpush1.msra.mxu0 0.0
    %725 = vmatprep.subr.mxu0 0.0
    %726 = vmatpush1.msra.mxu0 0.0
    %727 = vmatprep.subr.mxu0 0.0
    %728 = vmatpush1.msra.mxu0 0.0
    %729 = vmatprep.subr.mxu0 0.0
    %730 = vmatpush1.msra.mxu0 0.0
    %731 = vmatprep.subr.mxu0 0.0
    %732 = vmatpush1.msra.mxu0 0.0
    %733 = vmatprep.subr.mxu0 0.0
    %734 = vmatpush1.msra.mxu0 0.0
    %735 = vmatprep.subr.mxu0 0.0
    %736 = vmatpush1.msra.mxu0 0.0
    %737 = vmatprep.mubr.f32.mxu0 0.0
    %738 = vmatmul.mubr.f32.gmra.mrb[0].mxu0 %v671
    %v739 = vpop.f32.mrb[0].mxu0
    %v740 = vadd.f32 0.0, %v739
    %v741 = vpop.f32.mrb[0].mxu0
    %742 = vdwg.mxu0
    %v744 = vrot.slane %v740, 2
    %v746 = vadd.f32 %v163, %v744
    %v747 = vxor.u32 %v746, 2147483648
    %v748 = vmul.f32 %v747, 1.442695
    %v749 = vpow.pop %v748
    %v750 = vadd.f32 %v749, 1.0
    %v751 = vrcp.pop %v750
    %v752 = vmul.f32 1.0, %v751
    %v753 = vsel %vm161, %v752, %v746
    %v755 = vrot.slane %v746, 6
    %v756 = vsel %vm82, %v755, 0
    %758 = vmatprep.subr.mxu0 0.0
    %759 = vmatpush1.msra.mxu0 %v66
    %760 = vmatprep.subr.mxu0 0.0
    %761 = vmatpush1.msra.mxu0 %v67
    %762 = vmatprep.subr.mxu0 0.0
    %763 = vmatpush1.msra.mxu0 %v68
    %764 = vmatprep.subr.mxu0 0.0
    %765 = vmatpush1.msra.mxu0 %v69
    %766 = vmatprep.subr.mxu0 0.0
    %767 = vmatpush1.msra.mxu0 0.0
    %768 = vmatprep.subr.mxu0 0.0
    %769 = vmatpush1.msra.mxu0 0.0
    %770 = vmatprep.subr.mxu0 0.0
    %771 = vmatpush1.msra.mxu0 0.0
    %772 = vmatprep.subr.mxu0 0.0
    %773 = vmatpush1.msra.mxu0 0.0
    %774 = vmatprep.subr.mxu0 0.0
    %775 = vmatpush1.msra.mxu0 0.0
    %776 = vmatprep.subr.mxu0 0.0
    %777 = vmatpush1.msra.mxu0 0.0
    %778 = vmatprep.subr.mxu0 0.0
    %779 = vmatpush1.msra.mxu0 0.0
    %780 = vmatprep.subr.mxu0 0.0
    %781 = vmatpush1.msra.mxu0 0.0
    %782 = vmatprep.subr.mxu0 0.0
    %783 = vmatpush1.msra.mxu0 0.0
    %784 = vmatprep.subr.mxu0 0.0
    %785 = vmatpush1.msra.mxu0 0.0
    %786 = vmatprep.subr.mxu0 0.0
    %787 = vmatpush1.msra.mxu0 0.0
    %788 = vmatprep.subr.mxu0 0.0
    %789 = vmatpush1.msra.mxu0 0.0
    %790 = vmatprep.subr.mxu0 0.0
    %791 = vmatpush1.msra.mxu0 0.0
    %792 = vmatprep.subr.mxu0 0.0
    %793 = vmatpush1.msra.mxu0 0.0
    %794 = vmatprep.subr.mxu0 0.0
    %795 = vmatpush1.msra.mxu0 0.0
    %796 = vmatprep.subr.mxu0 0.0
    %797 = vmatpush1.msra.mxu0 0.0
    %798 = vmatprep.subr.mxu0 0.0
    %799 = vmatpush1.msra.mxu0 0.0
    %800 = vmatprep.subr.mxu0 0.0
    %801 = vmatpush1.msra.mxu0 0.0
    %802 = vmatprep.subr.mxu0 0.0
    %803 = vmatpush1.msra.mxu0 0.0
    %804 = vmatprep.subr.mxu0 0.0
    %805 = vmatpush1.msra.mxu0 0.0
    %806 = vmatprep.subr.mxu0 0.0
    %807 = vmatpush1.msra.mxu0 0.0
    %808 = vmatprep.subr.mxu0 0.0
    %809 = vmatpush1.msra.mxu0 0.0
    %810 = vmatprep.subr.mxu0 0.0
    %811 = vmatpush1.msra.mxu0 0.0
    %812 = vmatprep.subr.mxu0 0.0
    %813 = vmatpush1.msra.mxu0 0.0
    %814 = vmatprep.subr.mxu0 0.0
    %815 = vmatpush1.msra.mxu0 0.0
    %816 = vmatprep.subr.mxu0 0.0
    %817 = vmatpush1.msra.mxu0 0.0
    %818 = vmatprep.subr.mxu0 0.0
    %819 = vmatpush1.msra.mxu0 0.0
    %820 = vmatprep.subr.mxu0 0.0
    %821 = vmatpush1.msra.mxu0 0.0
    %822 = vmatprep.mubr.f32.mxu0 0.0
    %823 = vmatmul.mubr.f32.gmra.mrb[0].mxu0 %v756
    %v824 = vpop.f32.mrb[0].mxu0
    %v825 = vadd.f32 0.0, %v824
    %v826 = vpop.f32.mrb[0].mxu0
    %827 = vdwg.mxu0
    %v829 = vrot.slane %v825, 1
    %v831 = vadd.f32 %v163, %v829
    %v832 = vxor.u32 %v831, 2147483648
    %v833 = vmul.f32 %v832, 1.442695
    %v834 = vpow.pop %v833
    %v835 = vadd.f32 %v834, 1.0
    %v836 = vrcp.pop %v835
    %v837 = vmul.f32 1.0, %v836
    %v838 = vsel %vm161, %v837, %v831
    %vm839 = vcmask 1040384
    %v840 = vsel %vm839, %v244, %v328
    %vm841 = vcmask 1041408
    %v842 = vsel %vm841, %v840, %v413
    %vm843 = vcmask 1042432
    %v844 = vsel %vm843, %v842, %v498
    %vm845 = vcmask 1043456
    %v846 = vsel %vm845, %v844, %v583
    %vm847 = vcmask 1044480
    %v848 = vsel %vm847, %v846, %v668
    %vm849 = vcmask 1045504
    %v850 = vsel %vm849, %v848, %v753
    %vm851 = vcmask 1046528
    %v852 = vsel %vm851, %v850, %v838
    %853 = vst [vmem:[%s5] sm:$0xff] %v852
    %vm854 = vcmask 261127
    %855 = vst.msk [vmem:[#allocation2 - $0x7] sm:$0x80] %vm854, %v831
    // Predicated region
    $region38: #{elm_rnn_sequence.1} parent=1 // pred_check
      _
    $region39: #{elm_rnn_sequence.1} parent=1 // pred_check_branch
      %857 = sbr.rel (0) target = $region41
    $region40: #{elm_rnn_sequence.1} parent=1 // pred_region
      _
    $region41: #{elm_rnn_sequence.1} parent=1 // pred_fallthru
      _
    // Predicated region
    $region42: #{elm_rnn_sequence.1} parent=1 // pred_check
      _
    $region43: #{elm_rnn_sequence.1} parent=1 // pred_check_branch
      %859 = sbr.rel (0) target = $region45
    $region44: #{elm_rnn_sequence.1} parent=1 // pred_region
      _
    $region45: #{elm_rnn_sequence.1} parent=1 // pred_fallthru
      _
    %860 = vsyncpa [#allocation4], 1
    %861 = vsyncpa [#allocation6], 1

</llo_original>
